<compile_context>
chip_gen: v7x
topology: tpu7x:2x2x1
jax: 0.10.0
libtpu: 0.0.40
codegen_flags: <defaults>
</compile_context>

<pallas_src>
import jax
import jax.numpy as jnp
from jax.experimental import pallas as pl
from jax.experimental.pallas import tpu as pltpu


# ---------------- Pallas kernel (backward only) ----------------

_LANES = 1024          # lane-dense last dim (multiple of 128)
_MAX_TILE_ROWS = 512   # 512 x 1024 x 4B = 2 MiB per f32 tile


def _neg_scale_kernel(lamb_ref, g_ref, o_ref):
    # dx = g * (-lamb); lamb read from SMEM at runtime (one sld + VPU bcast).
    neg_lamb = (-lamb_ref[0]).astype(o_ref.dtype)
    o_ref[...] = g_ref[...] * neg_lamb


def _round_up(x, m):
    return ((x + m - 1) // m) * m


def _neg_scale_pallas(g, lamb):
    """Compute g * (-lamb) with a tiled, lane-dense Pallas kernel."""
    orig_shape = g.shape
    orig_dtype = g.dtype
    total = g.size

    # Flatten to a lane-dense 2D slab (rows, 1024); pad rows so the block
    # shape divides the array (and satisfies the (8, 128) tiling constraint).
    n_rows = -(-total // _LANES)
    tile_rows = min(_MAX_TILE_ROWS, _round_up(max(n_rows, 1), 8))
    padded_rows = _round_up(max(n_rows, 1), tile_rows)
    padded_total = padded_rows * _LANES

    flat = jnp.ravel(g)
    if padded_total != total:
        flat = jnp.pad(flat, (0, padded_total - total))
    slab = flat.reshape(padded_rows, _LANES)

    # Runtime scalar in SMEM -> one compiled kernel for every lamb value.
    lamb_arr = jnp.reshape(lamb, (1,)).astype(jnp.float32)

    out = pl.pallas_call(
        _neg_scale_kernel,
        out_shape=jax.ShapeDtypeStruct((padded_rows, _LANES), orig_dtype),
        grid_spec=pltpu.PrefetchScalarGridSpec(
            num_scalar_prefetch=0,
            grid=(padded_rows // tile_rows,),
            in_specs=[
                pl.BlockSpec(memory_space=pltpu.MemorySpace.SMEM),   # lamb
                pl.BlockSpec((tile_rows, _LANES), lambda i: (i, 0)),  # grad
            ],
            out_specs=pl.BlockSpec((tile_rows, _LANES), lambda i: (i, 0)),
        ),
        compiler_params=pltpu.CompilerParams(
            dimension_semantics=("parallel",)),
    )(lamb_arr, slab)

    out_flat = out.reshape(-1)
    if padded_total != total:
        out_flat = out_flat[:total]
    return out_flat.reshape(orig_shape)


# ---------------- custom_vjp wiring (glue) ----------------

@jax.custom_vjp
def grad_reverse(x, lamb):
    # Forward is identity (view_as(x) in torch); no kernel, no copy.
    return x


def _grad_reverse_fwd(x, lamb):
    return x, (lamb,)


def _grad_reverse_bwd(res, g):
    (lamb,) = res
    # lamb is a hyperparameter: zero cotangent.
    return _neg_scale_pallas(g, lamb), jnp.zeros_like(lamb)


grad_reverse.defvjp(_grad_reverse_fwd, _grad_reverse_bwd)


class GradReverseLayer:
    """JAX/Pallas equivalent of the PyTorch GradReverseLayer."""

    def __init__(self, lamb):
        self.lamb = float(lamb)

    def __call__(self, x):
        return grad_reverse(x, jnp.asarray(self.lamb, dtype=jnp.float32))


# ---------------- demo ----------------

if __name__ == "__main__":
    key = jax.random.PRNGKey(0)
    # NCHW input, small shapes: batch=2, channels=4, spatial=16
    x = jax.random.normal(key, (2, 4, 16, 16), dtype=jnp.float32)

    lamb = 0.5
    layer = GradReverseLayer(lamb)

    # Forward pass: identity (no Pallas call, no copy).
    y = layer(x)
    y = jax.block_until_ready(y)
    assert y.shape == x.shape and y.dtype == x.dtype
    assert jnp.allclose(y, x)

    # Backward pass through the Pallas kernel:
    # grad of sum(layer(x)) must be -lamb everywhere.
    grads = jax.grad(lambda v: jnp.sum(layer(v)))(x)
    grads = jax.block_until_ready(grads)
    assert grads.shape == x.shape and grads.dtype == x.dtype
    assert jnp.allclose(grads, jnp.full_like(x, -lamb))

    print("KERNEL_OK")
</pallas_src>

<mosaic_0001>
module attributes {stable_mosaic.version = 11 : i64} {
  func.func @_neg_scale_kernel(%arg0: i32, %arg1: memref<1xf32, #tpu.memory_space<smem>>, %arg2: memref<8x1024xf32, #tpu.memory_space<vmem>>, %arg3: memref<8x1024xf32, #tpu.memory_space<vmem>>) attributes {dimension_semantics = [#tpu.dimension_semantics<parallel>], iteration_bounds = array<i64: 1>, scalar_prefetch = 0 : i64, scratch_operands = 0 : i64, tpu.core_type = #tpu.core_type<tc>, window_params = [{transform_indices = @transform_0, window_bounds = array<i64: 1>}, {transform_indices = @transform_1, window_bounds = array<i64: 8, 1024>}, {transform_indices = @transform_2, window_bounds = array<i64: 8, 1024>}]} {
    %c0 = arith.constant 0 : index
    %0 = memref.load %arg1[%c0] : memref<1xf32, #tpu.memory_space<smem>>
    %cst = arith.constant 0.000000e+00 : f32
    %1 = arith.subf %cst, %0 : f32
    %c0_0 = arith.constant 0 : index
    %c0_1 = arith.constant 0 : index
    %2 = vector.load %arg2[%c0_0, %c0_1] : memref<8x1024xf32, #tpu.memory_space<vmem>>, vector<8x1024xf32>
    %3 = vector.broadcast %1 : f32 to vector<8x1024xf32>
    %4 = arith.mulf %2, %3 : vector<8x1024xf32>
    %c0_2 = arith.constant 0 : index
    %c0_3 = arith.constant 0 : index
    %5 = vector.load %arg3[%c0_2, %c0_3] : memref<8x1024xf32, #tpu.memory_space<vmem>>, vector<8x1024xf32>
    tpu.vector_store %arg3[%c0_2, %c0_3], %4 {strides = array<i32>} : memref<8x1024xf32, #tpu.memory_space<vmem>>, vector<8x1024xf32>,
    return
  }
  func.func @transform_0(%arg0: i32) -> i32 {
    %c0_i32 = arith.constant 0 : i32
    %c0_i32_0 = arith.constant 0 : i32
    return %c0_i32 : i32
  }
  func.func @transform_1(%arg0: i32) -> (i32, i32) {
    %c0_i32 = arith.constant 0 : i32
    %c0_i32_0 = arith.constant 0 : i32
    return %arg0, %c0_i32 : i32, i32
  }
  func.func @transform_2(%arg0: i32) -> (i32, i32) {
    %c0_i32 = arith.constant 0 : i32
    %c0_i32_0 = arith.constant 0 : i32
    return %arg0, %c0_i32 : i32, i32
  }
}

</mosaic_0001>

<llo_original>
// kernel: tpu_custom_call.1
$region0: #{tpu_custom_call.1}
  #allocation0 [shape = 'u32[]', space=smem, size = 0x4, offset = 0x4, fixed_abs, tag = 'smem constant byte address 0x4 - core index']
  #allocation1 [shape = 'u32[144,128]{1,0:T(1,128)}', space=vmem, size = 0x12000, scoped, tag = 'internal scratch']
  #allocation2 [shape = 'f32[1]{0:T(128)S(6)}', space=smem, size = 0x200, scoped, tag = 'scoped memory for tpu_custom_call.1']
  %s0 = inlined_call_operand.<no memory space> [shape: f32[1], index: 0, kind: input, shape index: {}]
  %s1 = inlined_call_operand.hbm [shape: f32[8,1024], index: 1, kind: input, shape index: {}]
  %s2 = inlined_call_operand.hbm [shape: f32[8,1024], index: 2, kind: output, shape index: {}]
  %s3 = sld [smem:[#allocation0]]
  $region22: #{tpu_custom_call.1} parent=0
    _
  %s5 = ssub.s32 1, %s3
  %s6 = scalar_select 0, %s5, %s3
  %7 = sst [smem:[#allocation2]] %s0
  $region1: #{tpu_custom_call.1} parent=0
    #allocation3 [shape = 'u8[32768]{0}', space=vmem, size = 0x8000, scoped, tag = 'input window, operand 1, single buffered']
    #allocation4 [shape = 's32[1]{0}', space=sflag, size = 0x4, scoped, tag = 'scoped memory for tpu_custom_call.1']
    #allocation5 [shape = 's32[1]{0}', space=sflag, size = 0x4, scoped, tag = 'scoped memory for tpu_custom_call.1']
    #allocation6 [shape = 'u8[32768]{0}', space=vmem, size = 0x8000, scoped, tag = 'output window, operand 0, single buffered']
    %8 = vsyncpa [#allocation4], 0
    %9 = vsyncpa [#allocation5], 0
    // Predicated region
    $region2: #{tpu_custom_call.1} parent=1 // pred_check
      _
    $region3: #{tpu_custom_call.1} parent=1 // pred_check_branch
      %11 = sbr.rel (0) target = $region5
    $region4: #{tpu_custom_call.1} parent=1 // pred_region
      _
    $region5: #{tpu_custom_call.1} parent=1 // pred_fallthru
      _
    // Predicated region
    $region6: #{tpu_custom_call.1} parent=1 // pred_check
      _
    $region7: #{tpu_custom_call.1} parent=1 // pred_check_branch
      %13 = sbr.rel (0) target = $region9
    $region8: #{tpu_custom_call.1} parent=1 // pred_region
      %s15 = ssub.s32 1024, 1024
      %16 = vsyncadd [#allocation4], %s15
      %s18 = sshll.u32 [#allocation3], 4
      %s19 = int_to_ptr.vmem [resolvable:$true] %s18
      %21 = dma.hbm_to_vmem [thread:$0]  %s1, 1024, %s19, [#allocation4]
    $region9: #{tpu_custom_call.1} parent=1 // pred_fallthru
      _
    // Predicated region
    $region10: #{tpu_custom_call.1} parent=1 // pred_check
      _
    $region11: #{tpu_custom_call.1} parent=1 // pred_check_branch
      %23 = sbr.rel (0) target = $region13
    $region12: #{tpu_custom_call.1} parent=1 // pred_region
      %24 = dma.done [#allocation4], 1024
    $region13: #{tpu_custom_call.1} parent=1 // pred_fallthru
      _
    %s25 = sld [smem:[#allocation2]]
    %s26 = ssub.f32 0.0, %s25
    %v27 = vld [vmem:[#allocation3] sm:$0xff]
    %v28 = vld [vmem:[#allocation3 + $0x8] sm:$0xff]
    %v29 = vld [vmem:[#allocation3 + $0x10] sm:$0xff]
    %v30 = vld [vmem:[#allocation3 + $0x18] sm:$0xff]
    %v31 = vld [vmem:[#allocation3 + $0x20] sm:$0xff]
    %v32 = vld [vmem:[#allocation3 + $0x28] sm:$0xff]
    %v33 = vld [vmem:[#allocation3 + $0x30] sm:$0xff]
    %v34 = vld [vmem:[#allocation3 + $0x38] sm:$0xff]
    %v35 = vstv %s26
    %v36 = vmul.f32 %v27, %v35
    %v37 = vmul.f32 %v28, %v35
    %v38 = vmul.f32 %v29, %v35
    %v39 = vmul.f32 %v30, %v35
    %v40 = vmul.f32 %v31, %v35
    %v41 = vmul.f32 %v32, %v35
    %v42 = vmul.f32 %v33, %v35
    %v43 = vmul.f32 %v34, %v35
    %44 = vst [vmem:[#allocation6] sm:$0xff] %v36
    %45 = vst [vmem:[#allocation6 + $0x8] sm:$0xff] %v37
    %46 = vst [vmem:[#allocation6 + $0x10] sm:$0xff] %v38
    %47 = vst [vmem:[#allocation6 + $0x18] sm:$0xff] %v39
    %48 = vst [vmem:[#allocation6 + $0x20] sm:$0xff] %v40
    %49 = vst [vmem:[#allocation6 + $0x28] sm:$0xff] %v41
    %50 = vst [vmem:[#allocation6 + $0x30] sm:$0xff] %v42
    %51 = vst [vmem:[#allocation6 + $0x38] sm:$0xff] %v43
    // Predicated region
    $region14: #{tpu_custom_call.1} parent=1 // pred_check
      _
    $region15: #{tpu_custom_call.1} parent=1 // pred_check_branch
      %53 = sbr.rel (0) target = $region17
    $region16: #{tpu_custom_call.1} parent=1 // pred_region
      %s55 = ssub.s32 1024, 1024
      %56 = vsyncadd [#allocation5], %s55
      %s58 = sshll.u32 [#allocation6], 4
      %s59 = int_to_ptr.vmem [resolvable:$true] %s58
      %61 = dma.vmem_to_hbm [thread:$0]  %s59, 1024, %s2, [#allocation5]
    $region17: #{tpu_custom_call.1} parent=1 // pred_fallthru
      _
    // Predicated region
    $region18: #{tpu_custom_call.1} parent=1 // pred_check
      _
    $region19: #{tpu_custom_call.1} parent=1 // pred_check_branch
      %63 = sbr.rel (0) target = $region21
    $region20: #{tpu_custom_call.1} parent=1 // pred_region
      %64 = dma.done [#allocation5], 1024
    $region21: #{tpu_custom_call.1} parent=1 // pred_fallthru
      _
    %65 = vsyncpa [#allocation4], 1
    %66 = vsyncpa [#allocation5], 1

</llo_original>
